<compile_context>
chip_gen: v6e
topology: v6e:2x2x1
jax: 0.10.0
libtpu: 0.0.40
codegen_flags: <defaults>
</compile_context>

<pallas_src>
import jax
import jax.numpy as jnp
from jax import lax
from jax.experimental import pallas as pl
from jax.experimental.pallas import tpu as pltpu


_SMALL_BYTES = 2 * 1024 * 1024        # <= this -> single gridless whole-array kernel
_TARGET_TILE_BYTES = 4 * 1024 * 1024  # per-block target for the tiled path
_PAD_LANES = 1024                     # lane width used by the padding fallback


def _gelu_add_kernel(add_ref, x_ref, o_ref):
    """o = exact_gelu(x) + add_num.  add_ref is a (1,) float32 SMEM scalar."""
    x = x_ref[...].astype(jnp.float32)
    add_num = add_ref[0]
    inv_sqrt2 = jnp.float32(0.7071067811865476)
    # exact GELU: x * 0.5 * (1 + erf(x / sqrt(2))) -- matches nn.GELU() default.
    g = x * jnp.float32(0.5) * (jnp.float32(1.0) + lax.erf(x * inv_sqrt2))
    o_ref[...] = (g + add_num).astype(o_ref.dtype)


def _pick_lane_width(total):
    """Largest lane-dense width (multiple of 128) that divides the element count."""
    for lanes in (4096, 2048, 1024, 512, 256, 128):
        if total % lanes == 0:
            return lanes
    return None


def _gelu_add_small(x2d, add_arr):
    """Gridless whole-array kernel for tiny payloads (no per-step pipeline cost)."""
    return pl.pallas_call(
        _gelu_add_kernel,
        out_shape=jax.ShapeDtypeStruct(x2d.shape, x2d.dtype),
        in_specs=[
            pl.BlockSpec(memory_space=pltpu.MemorySpace.SMEM),  # add_num
            pl.BlockSpec(memory_space=pltpu.MemorySpace.VMEM),  # x (whole array)
        ],
        out_specs=pl.BlockSpec(memory_space=pltpu.MemorySpace.VMEM),
        input_output_aliases={1: 0},
    )(add_arr, x2d)


def _select_tile_rows(rows, cols, itemsize):
    """Byte-targeted tile rows (multiple of 8), with >= 2 grid steps when possible."""
    tr = _TARGET_TILE_BYTES // max(1, cols * itemsize)
    tr = max(8, (tr // 8) * 8)
    if rows > 8:
        # Guarantee at least 2 grid steps so both v7x TensorCores get work
        # (no-op on single-TC v5e/v6e).
        half = ((rows + 1) // 2 + 7) // 8 * 8
        tr = min(tr, max(8, half))
    return min(tr, rows)


def _gelu_add_tiled(x2d, add_arr):
    """Lane-dense, double-buffered, parallel-grid path for non-toy payloads."""
    rows, cols = x2d.shape
    tile_rows = _select_tile_rows(rows, cols, x2d.dtype.itemsize)
    grid = (pl.cdiv(rows, tile_rows),)  # ragged last block is fine (elementwise)
    return pl.pallas_call(
        _gelu_add_kernel,
        out_shape=jax.ShapeDtypeStruct((rows, cols), x2d.dtype),
        grid_spec=pl.GridSpec(
            grid=grid,
            in_specs=[
                pl.BlockSpec(memory_space=pltpu.MemorySpace.SMEM),      # add_num (untiled)
                pl.BlockSpec((tile_rows, cols), lambda i: (i, 0)),      # x tile
            ],
            out_specs=pl.BlockSpec((tile_rows, cols), lambda i: (i, 0)),
        ),
        compiler_params=pltpu.CompilerParams(
            dimension_semantics=("parallel",),
            # ~4 MiB blocks * 4 live buffers (in x2 + out x2) = ~16 MiB; 32 MiB
            # covers v5e's 16 MiB scoped default and is within v7x's 64 MiB.
            vmem_limit_bytes=32 * 1024 * 1024,
        ),
        input_output_aliases={1: 0},
    )(add_arr, x2d)


def tiny_net_forward(x, add_num=0.2):
    """x: any-shape float array -- returns exact GELU(x) + add_num, same shape/dtype."""
    orig_shape = x.shape
    total = int(x.size)
    nbytes = total * x.dtype.itemsize
    # Scalar always travels as f32 through SMEM (32-bit scalar path); result is
    # cast back to x.dtype inside the kernel.
    add_arr = jnp.asarray([add_num], dtype=jnp.float32)

    lanes = _pick_lane_width(total)

    if nbytes <= _SMALL_BYTES:
        # Tiny payload: one gridless kernel, lane-dense view if available.
        x2d = x.reshape(total // lanes, lanes) if lanes is not None else x.reshape(1, total)
        return _gelu_add_small(x2d, add_arr).reshape(orig_shape)

    if lanes is not None:
        x2d = x.reshape(total // lanes, lanes)
        return _gelu_add_tiled(x2d, add_arr).reshape(orig_shape)

    # Rare fallback: element count not a multiple of 128 -> pad the flat view to
    # a lane-dense width, run the tiled kernel, slice the padding back off.
    pad = (-total) % _PAD_LANES
    flat = jnp.pad(x.reshape(total), (0, pad))
    out = _gelu_add_tiled(flat.reshape(-1, _PAD_LANES), add_arr)
    return out.reshape(-1)[:total].reshape(orig_shape)


def _reference(x, add_num=0.2):
    # pure-JAX reference: exact GELU (matches nn.GELU() default) + add_num.
    return jax.nn.gelu(x, approximate=False) + add_num


if __name__ == "__main__":
    # Spec shape from TinyNet usage: NCHW (2, 4, 16, 16) -- gridless small path.
    x = jax.random.normal(jax.random.PRNGKey(0), (2, 4, 16, 16), dtype=jnp.float32)
    y_ref = _reference(x, 0.2)
    y = jax.block_until_ready(tiny_net_forward(x, 0.2))
    assert y.shape == x.shape and y.dtype == x.dtype
    assert jnp.allclose(y, y_ref, atol=1e-5, rtol=1e-5), "mismatch vs reference (small)"

    # Tiled lane-dense path: 4 MiB payload, 128-divisible element count.
    x_big = jax.random.normal(
        jax.random.PRNGKey(1), (16, 256, 16, 16), dtype=jnp.float32
    )
    y_big_ref = _reference(x_big, -0.3)
    y_big = jax.block_until_ready(tiny_net_forward(x_big, -0.3))
    assert jnp.allclose(y_big, y_big_ref, atol=1e-5, rtol=1e-5), "mismatch (tiled)"

    # Ragged path: > 2 MiB payload whose element count is NOT a multiple of 128
    # (exercises the pad-and-slice fallback + cdiv ragged last block).
    x_odd = jax.random.normal(
        jax.random.PRNGKey(2), (3, 7, 181, 191), dtype=jnp.float32
    )
    y_odd_ref = _reference(x_odd, 0.2)
    y_odd = jax.block_until_ready(tiny_net_forward(x_odd, 0.2))
    assert jnp.allclose(y_odd, y_odd_ref, atol=1e-5, rtol=1e-5), "mismatch (ragged)"

    print("KERNEL_OK")
</pallas_src>

<mosaic_0001>
module attributes {stable_mosaic.version = 11 : i64} {
  func.func @_gelu_add_kernel(%arg0: memref<1xf32, #tpu.memory_space<smem>>, %arg1: memref<1x2048xf32, #tpu.memory_space<vmem>>, %arg2: memref<1x2048xf32, #tpu.memory_space<vmem>>) attributes {dimension_semantics = [], scalar_prefetch = 0 : i64, scratch_operands = 0 : i64, tpu.core_type = #tpu.core_type<tc>} {
    %c0 = arith.constant 0 : index
    %c0_0 = arith.constant 0 : index
    %0 = vector.load %arg1[%c0, %c0_0] : memref<1x2048xf32, #tpu.memory_space<vmem>>, vector<1x2048xf32>
    %c0_1 = arith.constant 0 : index
    %1 = memref.load %arg0[%c0_1] : memref<1xf32, #tpu.memory_space<smem>>
    %cst = arith.constant 5.000000e-01 : f32
    %2 = vector.broadcast %cst : f32 to vector<1x2048xf32>
    %3 = arith.mulf %0, %2 : vector<1x2048xf32>
    %cst_2 = arith.constant 0.707106769 : f32
    %4 = vector.broadcast %cst_2 : f32 to vector<1x2048xf32>
    %5 = arith.mulf %0, %4 : vector<1x2048xf32>
    %6 = math.erf %5 : vector<1x2048xf32>
    %cst_3 = arith.constant 1.000000e+00 : f32
    %7 = vector.broadcast %cst_3 : f32 to vector<1x2048xf32>
    %8 = arith.addf %7, %6 : vector<1x2048xf32>
    %9 = arith.mulf %3, %8 : vector<1x2048xf32>
    %10 = vector.broadcast %1 : f32 to vector<1x2048xf32>
    %11 = arith.addf %9, %10 : vector<1x2048xf32>
    %c0_4 = arith.constant 0 : index
    %c0_5 = arith.constant 0 : index
    %12 = vector.load %arg2[%c0_4, %c0_5] : memref<1x2048xf32, #tpu.memory_space<vmem>>, vector<1x2048xf32>
    tpu.vector_store %arg2[%c0_4, %c0_5], %11 {strides = array<i32>} : memref<1x2048xf32, #tpu.memory_space<vmem>>, vector<1x2048xf32>,
    return
  }
}

</mosaic_0001>

<llo_original>
// kernel: tpu_custom_call.1
$region0: #{tpu_custom_call.1}
  #allocation0 [shape = 'u32[]', space=smem, size = 0x4, offset = 0x4, fixed_abs, tag = 'smem constant byte address 0x4 - core index']
  #allocation1 [shape = 'u32[144,128]{1,0:T(1,128)}', space=vmem, size = 0x12000, scoped, tag = 'internal scratch']
  #allocation2 [shape = 'f32[1]{0:T(128)S(6)}', space=smem, size = 0x200, scoped, tag = 'scoped memory for tpu_custom_call.1']
  %s0 = inlined_call_operand.<no memory space> [shape: f32[1], index: 0, kind: input, shape index: {}]
  %s1 = inlined_call_operand.hbm [shape: f32[1,2048], index: 1, kind: input, shape index: {}, may-alias: {1,2}]
  %s2 = inlined_call_operand.hbm [shape: f32[1,2048], index: 2, kind: output, shape index: {}, may-alias: {1,2}]
  %s3 = sld [smem:[#allocation0]]
  $region22: #{tpu_custom_call.1} parent=0
    _
  %s5 = ssub.s32 1, %s3
  %s6 = scalar_select 0, %s5, %s3
  %7 = sst [smem:[#allocation2]] %s0
  $region1: #{tpu_custom_call.1} parent=0
    #allocation3 [shape = 'u8[8192]{0}', space=vmem, size = 0x2000, scoped, tag = 'input window, operand 1, single buffered']
    #allocation4 [shape = 's32[1]{0}', space=sflag, size = 0x4, scoped, tag = 'scoped memory for tpu_custom_call.1']
    #allocation5 [shape = 's32[1]{0}', space=sflag, size = 0x4, scoped, tag = 'scoped memory for tpu_custom_call.1']
    #allocation6 [shape = 'u8[8192]{0}', space=vmem, size = 0x2000, scoped, tag = 'output window, operand 0, single buffered']
    %8 = vsyncpa [#allocation4], 0
    %9 = vsyncpa [#allocation5], 0
    // Predicated region
    $region2: #{tpu_custom_call.1} parent=1 // pred_check
      _
    $region3: #{tpu_custom_call.1} parent=1 // pred_check_branch
      %11 = sbr.rel (0) target = $region5
    $region4: #{tpu_custom_call.1} parent=1 // pred_region
      _
    $region5: #{tpu_custom_call.1} parent=1 // pred_fallthru
      _
    // Predicated region
    $region6: #{tpu_custom_call.1} parent=1 // pred_check
      _
    $region7: #{tpu_custom_call.1} parent=1 // pred_check_branch
      %13 = sbr.rel (0) target = $region9
    $region8: #{tpu_custom_call.1} parent=1 // pred_region
      %s15 = ssub.s32 256, 256
      %16 = vsyncadd [#allocation4], %s15
      %s18 = sshll.u32 [#allocation3], 4
      %s19 = int_to_ptr.vmem [resolvable:$true] %s18
      %21 = dma.hbm_to_vmem [thread:$0]  %s1, 256, %s19, [#allocation4]
    $region9: #{tpu_custom_call.1} parent=1 // pred_fallthru
      _
    // Predicated region
    $region10: #{tpu_custom_call.1} parent=1 // pred_check
      _
    $region11: #{tpu_custom_call.1} parent=1 // pred_check_branch
      %23 = sbr.rel (0) target = $region13
    $region12: #{tpu_custom_call.1} parent=1 // pred_region
      %24 = dma.done [#allocation4], 256
    $region13: #{tpu_custom_call.1} parent=1 // pred_fallthru
      _
    %v25 = vld [vmem:[#allocation3] sm:$0xff]
    %v26 = vld [vmem:[#allocation3 + $0x8] sm:$0xff]
    %s27 = sld [smem:[#allocation2]]
    %v28 = vmul.f32 %v25, 0.5
    %v29 = vmul.f32 %v26, 0.5
    %v30 = vmul.f32 %v25, 0.70710677
    %v31 = vmul.f32 %v26, 0.70710677
    %v32 = verf.f32.pop %v30
    %v33 = verf.f32.pop %v31
    %v34 = vadd.f32 %v32, 1.0
    %v35 = vadd.f32 %v33, 1.0
    %v36 = vmul.f32 %v28, %v34
    %v37 = vmul.f32 %v29, %v35
    %v38 = vstv %s27
    %v39 = vadd.f32 %v36, %v38
    %v40 = vadd.f32 %v37, %v38
    %41 = vst [vmem:[#allocation6] sm:$0xff] %v39
    %42 = vst [vmem:[#allocation6 + $0x8] sm:$0xff] %v40
    // Predicated region
    $region14: #{tpu_custom_call.1} parent=1 // pred_check
      _
    $region15: #{tpu_custom_call.1} parent=1 // pred_check_branch
      %44 = sbr.rel (0) target = $region17
    $region16: #{tpu_custom_call.1} parent=1 // pred_region
      %s46 = ssub.s32 256, 256
      %47 = vsyncadd [#allocation5], %s46
      %s49 = sshll.u32 [#allocation6], 4
      %s50 = int_to_ptr.vmem [resolvable:$true] %s49
      %52 = dma.vmem_to_hbm [thread:$0]  %s50, 256, %s2, [#allocation5]
    $region17: #{tpu_custom_call.1} parent=1 // pred_fallthru
      _
    // Predicated region
    $region18: #{tpu_custom_call.1} parent=1 // pred_check
      _
    $region19: #{tpu_custom_call.1} parent=1 // pred_check_branch
      %54 = sbr.rel (0) target = $region21
    $region20: #{tpu_custom_call.1} parent=1 // pred_region
      %55 = dma.done [#allocation5], 256
    $region21: #{tpu_custom_call.1} parent=1 // pred_fallthru
      _
    %56 = vsyncpa [#allocation4], 1
    %57 = vsyncpa [#allocation5], 1

</llo_original>
